<compile_context>
chip_gen: v5e
topology: v5e:2x2
jax: 0.10.0
libtpu: 0.0.40
codegen_flags: <defaults>
</compile_context>

<pallas_src>
import numpy as np
import jax
import jax.numpy as jnp
from jax import lax
from jax.experimental import pallas as pl
from jax.experimental.pallas import tpu as pltpu


def _round_up(a, b):
    return ((a + b - 1) // b) * b


def _gl_matmul_kernel(x_ref, w_ref, b_ref, o_ref):
    # x_ref: (TM, C) bf16 | w_ref: (O, C) bf16 | b_ref: (1, O) f32 | o_ref: (TM, O) f32
    acc = lax.dot_general(
        x_ref[...], w_ref[...],
        dimension_numbers=(((1,), (1,)), ((), ())),   # contract over C; weight in native (O, C)
        preferred_element_type=jnp.float32,
    )
    o_ref[...] = (acc + b_ref[...]).astype(o_ref.dtype)


def gl_layer_forward(x, l_w, l_b, indices, out_features,
                     *, compute_dtype=jnp.bfloat16, tile_m=512):
    """Forward pass of GLLayer.

    x: (L, N, C) float32, l_w: (out_features, C), l_b: (out_features,) or None
    indices: static np.ndarray of selected output channels, shape (top_k,)
    Returns (out, idx_rep): out (L, N, out_features) f32, idx_rep (N, top_k) i32.
    """
    L, N, C = x.shape
    top_k = int(indices.shape[0])

    if top_k == 0:
        # Mirrors the PyTorch early return exactly (including its odd (0, 0) 2nd output).
        return (jnp.zeros((L, N, out_features), jnp.float32),
                jnp.zeros((0, 0), jnp.float32))

    # --- Fold the static column gate into weight / bias (host-side, static indices) ---
    mask_np = np.zeros((out_features,), np.float32)
    mask_np[np.asarray(indices)] = 1.0
    mask = jnp.asarray(mask_np)

    w_masked = (l_w * mask[:, None]).astype(compute_dtype)            # (O, C)
    if l_b is not None:
        b_masked = (l_b * mask).reshape(1, out_features).astype(jnp.float32)
    else:
        b_masked = jnp.zeros((1, out_features), jnp.float32)

    x_flat = x.reshape(L * N, C).astype(compute_dtype)                # (M, C)
    M = L * N

    # --- Tile the M axis (budget chosen to fit comfortably in v7x's 64 MiB VMEM) ---
    TM = _round_up(M, 8) if M <= tile_m else tile_m
    M_pad = _round_up(M, TM)
    if M_pad != M:
        x_flat = jnp.pad(x_flat, ((0, M_pad - M), (0, 0)))

    y = pl.pallas_call(
        _gl_matmul_kernel,
        out_shape=jax.ShapeDtypeStruct((M_pad, out_features), jnp.float32),
        grid_spec=pl.GridSpec(
            grid=(M_pad // TM,),
            in_specs=[
                pl.BlockSpec((TM, C), lambda i: (i, 0)),              # x tile, pipelined over M
                pl.BlockSpec((out_features, C), lambda i: (0, 0)),    # weight resident
                pl.BlockSpec((1, out_features), lambda i: (0, 0)),    # bias resident
            ],
            out_specs=pl.BlockSpec((TM, out_features), lambda i: (i, 0)),
        ),
        compiler_params=pltpu.CompilerParams(
            dimension_semantics=("parallel",),   # independent M tiles -> megacore shard on v7x
            vmem_limit_bytes=64 * 1024 * 1024,
        ),
    )(x_flat, w_masked, b_masked)

    out = y[:M].reshape(L, N, out_features)

    if top_k == out_features:
        idx_rep = jnp.tile(jnp.arange(out_features, dtype=jnp.int32)[None, :], (N, 1))
    else:
        idx_rep = jnp.tile(jnp.asarray(indices, dtype=jnp.int32)[None, :], (N, 1))
    return out, idx_rep


if __name__ == "__main__":
    # Deterministic setup mirroring GLLayer.__init__(in_features, out_features, top_r)
    in_features = 32
    out_features = 32
    top_r = 0.5
    top_k = int(out_features * top_r)

    rng = np.random.RandomState(0)
    permutation = rng.permutation(out_features)       # register_buffer('permutation', randperm(...))
    indices = permutation[:top_k].astype(np.int32)    # self.indices

    key = jax.random.PRNGKey(0)
    kx, kw, kb = jax.random.split(key, 3)

    L, N = 8, 2                                       # (seq, batch)
    x = jax.random.normal(kx, (L, N, in_features), dtype=jnp.float32)
    l_w = jax.random.normal(kw, (out_features, in_features), dtype=jnp.float32) * 0.1
    l_b = jax.random.normal(kb, (out_features,), dtype=jnp.float32) * 0.1

    out, idx_rep = gl_layer_forward(x, l_w, l_b, indices, out_features)
    out = jax.block_until_ready(out)
    idx_rep = jax.block_until_ready(idx_rep)

    # Pure-JAX f32 reference for correctness (kernel uses bf16 inputs, f32 accumulation).
    ref_full = jnp.einsum("lnc,oc->lno", x, l_w) + l_b[None, None, :]
    mask = jnp.zeros((out_features,), jnp.float32).at[indices].set(1.0)
    ref = ref_full * mask[None, None, :]

    np.testing.assert_allclose(np.asarray(out), np.asarray(ref), rtol=3e-2, atol=3e-2)
    assert out.shape == (L, N, out_features)
    assert idx_rep.shape == (N, top_k)

    print("KERNEL_OK")
</pallas_src>

<mosaic_0001>
module attributes {stable_mosaic.version = 11 : i64} {
  func.func @_gl_matmul_kernel(%arg0: i32, %arg1: memref<16x32xbf16, #tpu.memory_space<vmem>>, %arg2: memref<32x32xbf16, #tpu.memory_space<vmem>>, %arg3: memref<1x32xf32, #tpu.memory_space<vmem>>, %arg4: memref<16x32xf32, #tpu.memory_space<vmem>>) attributes {dimension_semantics = [#tpu.dimension_semantics<parallel>], iteration_bounds = array<i64: 1>, scalar_prefetch = 0 : i64, scratch_operands = 0 : i64, tpu.core_type = #tpu.core_type<tc>, window_params = [{transform_indices = @transform_0, window_bounds = array<i64: 16, 32>}, {pipeline_mode = #tpu.pipeline_mode<synchronous>, transform_indices = @transform_1, window_bounds = array<i64: 32, 32>}, {pipeline_mode = #tpu.pipeline_mode<synchronous>, transform_indices = @transform_2, window_bounds = array<i64: 1, 32>}, {transform_indices = @transform_3, window_bounds = array<i64: 16, 32>}]} {
    %c0 = arith.constant 0 : index
    %c0_0 = arith.constant 0 : index
    %0 = vector.load %arg1[%c0, %c0_0] : memref<16x32xbf16, #tpu.memory_space<vmem>>, vector<16x32xbf16>
    %c0_1 = arith.constant 0 : index
    %c0_2 = arith.constant 0 : index
    %1 = vector.load %arg2[%c0_1, %c0_2] : memref<32x32xbf16, #tpu.memory_space<vmem>>, vector<32x32xbf16>
    %cst = arith.constant dense<0.000000e+00> : vector<16x32xf32>
    %2 = tpu.matmul %0, %1, %cst {dimension_numbers = #tpu.dot_dimension_numbers<[1], [1], [0], [0], [0, 0, 1, 0], [], []>} : vector<16x32xbf16>, vector<32x32xbf16>, vector<16x32xf32> -> vector<16x32xf32>
    %c0_3 = arith.constant 0 : index
    %c0_4 = arith.constant 0 : index
    %3 = vector.load %arg3[%c0_3, %c0_4] : memref<1x32xf32, #tpu.memory_space<vmem>>, vector<1x32xf32>
    %4 = vector.broadcast %3 : vector<1x32xf32> to vector<16x32xf32>
    %5 = arith.addf %2, %4 : vector<16x32xf32>
    %c0_5 = arith.constant 0 : index
    %c0_6 = arith.constant 0 : index
    %6 = vector.load %arg4[%c0_5, %c0_6] : memref<16x32xf32, #tpu.memory_space<vmem>>, vector<16x32xf32>
    tpu.vector_store %arg4[%c0_5, %c0_6], %5 {strides = array<i32>} : memref<16x32xf32, #tpu.memory_space<vmem>>, vector<16x32xf32>,
    return
  }
  func.func @transform_0(%arg0: i32) -> (i32, i32) {
    %c0_i32 = arith.constant 0 : i32
    %c0_i32_0 = arith.constant 0 : i32
    return %arg0, %c0_i32 : i32, i32
  }
  func.func @transform_1(%arg0: i32) -> (i32, i32) {
    %c0_i32 = arith.constant 0 : i32
    %c0_i32_0 = arith.constant 0 : i32
    %c0_i32_1 = arith.constant 0 : i32
    return %c0_i32, %c0_i32_0 : i32, i32
  }
  func.func @transform_2(%arg0: i32) -> (i32, i32) {
    %c0_i32 = arith.constant 0 : i32
    %c0_i32_0 = arith.constant 0 : i32
    %c0_i32_1 = arith.constant 0 : i32
    return %c0_i32, %c0_i32_0 : i32, i32
  }
  func.func @transform_3(%arg0: i32) -> (i32, i32) {
    %c0_i32 = arith.constant 0 : i32
    %c0_i32_0 = arith.constant 0 : i32
    return %arg0, %c0_i32 : i32, i32
  }
}

</mosaic_0001>

<llo_original>
// kernel: tpu_custom_call.1
$region0: #{tpu_custom_call.1}
  #allocation0 [shape = 'u32[]', space=smem, size = 0x4, offset = 0x4, fixed_abs, tag = 'smem constant byte address 0x4 - core index']
  #allocation1 [shape = 'u32[72,128]{1,0:T(1,128)}', space=vmem, size = 0x9000, scoped, tag = 'internal scratch']
  %s0 = inlined_call_operand.hbm [shape: bf16[16,32], index: 0, kind: input, shape index: {}]
  %s1 = inlined_call_operand.hbm [shape: bf16[32,32], index: 1, kind: input, shape index: {}]
  %s2 = inlined_call_operand.vmem [shape: f32[1,32], index: 2, kind: input, shape index: {}]
  %s3 = inlined_call_operand.hbm [shape: f32[16,32], index: 3, kind: output, shape index: {}]
  %s4 = sld [smem:[#allocation0]]
  $region30: #{tpu_custom_call.1} parent=0
    _
  %s6 = ssub.s32 1, %s4
  %s7 = scalar_select 0, %s6, %s4
  $region1: #{tpu_custom_call.1} parent=0
    #allocation2 [shape = 'u8[4096]{0}', space=vmem, size = 0x1000, scoped, tag = 'input window, operand 0, single buffered']
    #allocation3 [shape = 's32[1]{0}', space=sflag, size = 0x4, scoped, tag = 'scoped memory for tpu_custom_call.1']
    #allocation4 [shape = 's32[1]{0}', space=sflag, size = 0x4, scoped, tag = 'scoped memory for tpu_custom_call.1']
    #allocation5 [shape = 'u8[8192]{0}', space=vmem, size = 0x2000, scoped, tag = 'input window, operand 1, single buffered']
    #allocation6 [shape = 's32[1]{0}', space=sflag, size = 0x4, scoped, tag = 'scoped memory for tpu_custom_call.1']
    #allocation7 [shape = 'u8[8192]{0}', space=vmem, size = 0x2000, scoped, tag = 'output window, operand 0, single buffered']
    %8 = vsyncpa [#allocation3], 0
    %9 = vsyncpa [#allocation6], 0
    %10 = vsyncpa [#allocation4], 0
    // Predicated region
    $region2: #{tpu_custom_call.1} parent=1 // pred_check
      _
    $region3: #{tpu_custom_call.1} parent=1 // pred_check_branch
      %12 = sbr.rel (0) target = $region5
    $region4: #{tpu_custom_call.1} parent=1 // pred_region
      %14 = vsyncadd [#allocation3], 0
      %s15 = sshll.u32 %s0, 4
      %s16 = int_to_ptr.hbm [resolvable:$true] %s15
      %s17 = sshll.u32 [#allocation2], 4
      %s18 = int_to_ptr.vmem [resolvable:$true] %s17
      %23 = dma.hbm_to_vmem [thread:$0]  %s16, 128, %s18, [#allocation3], 64, 64, 4
    $region5: #{tpu_custom_call.1} parent=1 // pred_fallthru
      _
    // Predicated region
    $region6: #{tpu_custom_call.1} parent=1 // pred_check
      _
    $region7: #{tpu_custom_call.1} parent=1 // pred_check_branch
      %25 = sbr.rel (0) target = $region9
    $region8: #{tpu_custom_call.1} parent=1 // pred_region
      %27 = vsyncadd [#allocation6], 0
      %s28 = sshll.u32 %s1, 4
      %s29 = int_to_ptr.hbm [resolvable:$true] %s28
      %s30 = sshll.u32 [#allocation5], 4
      %s31 = int_to_ptr.vmem [resolvable:$true] %s30
      %36 = dma.hbm_to_vmem [thread:$0]  %s29, 256, %s31, [#allocation6], 64, 64, 4
    $region9: #{tpu_custom_call.1} parent=1 // pred_fallthru
      _
    // Predicated region
    $region10: #{tpu_custom_call.1} parent=1 // pred_check
      _
    $region11: #{tpu_custom_call.1} parent=1 // pred_check_branch
      %38 = sbr.rel (0) target = $region13
    $region12: #{tpu_custom_call.1} parent=1 // pred_region
      _
    $region13: #{tpu_custom_call.1} parent=1 // pred_fallthru
      _
    // Predicated region
    $region14: #{tpu_custom_call.1} parent=1 // pred_check
      _
    $region15: #{tpu_custom_call.1} parent=1 // pred_check_branch
      %40 = sbr.rel (0) target = $region17
    $region16: #{tpu_custom_call.1} parent=1 // pred_region
      %42 = dma.done [#allocation3], 128
    $region17: #{tpu_custom_call.1} parent=1 // pred_fallthru
      _
    // Predicated region
    $region18: #{tpu_custom_call.1} parent=1 // pred_check
      _
    $region19: #{tpu_custom_call.1} parent=1 // pred_check_branch
      %44 = sbr.rel (0) target = $region21
    $region20: #{tpu_custom_call.1} parent=1 // pred_region
      %46 = dma.done [#allocation6], 256
    $region21: #{tpu_custom_call.1} parent=1 // pred_fallthru
      _
    %v48 = vld [vmem:[#allocation2] sm:$0xf]
    %v49 = vld [vmem:[#allocation2 + $0x4] sm:$0xf]
    %v50 = vld [vmem:[#allocation5] sm:$0xf]
    %v51 = vld [vmem:[#allocation5 + $0x4] sm:$0xf]
    %v52 = vld [vmem:[#allocation5 + $0x8] sm:$0xf]
    %v53 = vld [vmem:[#allocation5 + $0xc] sm:$0xf]
    %v54 = vld [vmem:[%s2] sm:$0x1]
    %v56 = vperm.slane %v54, 0
    %v60 = vunpack.c.l.b16 %v48
    %v61 = vunpack.c.l.b16 %v49
    %v62 = vpack.c.b16 %v61, %v60
    %v67 = vunpack.c.l.b16 %v50
    %v68 = vunpack.c.l.b16 %v51
    %v69 = vunpack.c.l.b16 %v52
    %v70 = vunpack.c.l.b16 %v53
    %v71 = vpack.c.b16 %v68, %v67
    %v72 = vpack.c.b16 %v70, %v69
    %vm73 = vcmask 261120
    %v75 = vsel %vm73, %v62, 0
    %v78 = vsel %vm73, %v71, 0
    %v81 = vsel %vm73, %v72, 0
    %83 = vmatpush.bf16.xpose.msra.mxu0 0
    %84 = vmatpush.bf16.xpose.msra.mxu0 0
    %85 = vmatpush.bf16.xpose.msra.mxu0 0
    %86 = vmatpush.bf16.xpose.msra.mxu0 0
    %87 = vmatpush.bf16.xpose.msra.mxu0 0
    %88 = vmatpush.bf16.xpose.msra.mxu0 0
    %89 = vmatpush.bf16.xpose.msra.mxu0 %v81
    %90 = vmatpush.bf16.xpose.msra.mxu0 %v78
    %91 = vmatmul.bf16.gmra.mxu0 %v75
    %v92 = vpop.f32.mrf.mxu0
    %v93 = vadd.f32 %v56, %v92
    %v94 = vpop.f32.mrf.mxu0
    %v95 = vadd.f32 %v56, %v94
    %96 = vdwg.mxu0
    %97 = vst.msk [vmem:[#allocation7] sm:$0xff] %vm73, %v93
    %98 = vst.msk [vmem:[#allocation7 + $0x8] sm:$0xff] %vm73, %v95
    // Predicated region
    $region22: #{tpu_custom_call.1} parent=1 // pred_check
      _
    $region23: #{tpu_custom_call.1} parent=1 // pred_check_branch
      %100 = sbr.rel (0) target = $region25
    $region24: #{tpu_custom_call.1} parent=1 // pred_region
      %102 = vsyncadd [#allocation4], 0
      %s103 = sshll.u32 [#allocation7], 4
      %s104 = int_to_ptr.vmem [resolvable:$true] %s103
      %s105 = sshll.u32 %s3, 4
      %s106 = int_to_ptr.hbm [resolvable:$true] %s105
      %111 = dma.vmem_to_hbm [thread:$0]  %s104, 256, %s106, [#allocation4], 128, 128, 8
    $region25: #{tpu_custom_call.1} parent=1 // pred_fallthru
      _
    // Predicated region
    $region26: #{tpu_custom_call.1} parent=1 // pred_check
      _
    $region27: #{tpu_custom_call.1} parent=1 // pred_check_branch
      %113 = sbr.rel (0) target = $region29
    $region28: #{tpu_custom_call.1} parent=1 // pred_region
      %115 = dma.done [#allocation4], 256
    $region29: #{tpu_custom_call.1} parent=1 // pred_fallthru
      _
    %116 = vsyncpa [#allocation3], 1
    %117 = vsyncpa [#allocation6], 1
    %118 = vsyncpa [#allocation4], 1

</llo_original>
